<compile_context>
chip_gen: v5e
topology: v5e:2x2
jax: 0.10.0
libtpu: 0.0.40
codegen_flags: <defaults>
</compile_context>

<pallas_src>
import jax
import jax.numpy as jnp
from jax import lax
from jax.experimental import pallas as pl
from jax.experimental.pallas import tpu as pltpu

IN_DIM = 4
H1_DIM = 8
H2_DIM = 4
OUT_DIM = 2
LANE = 128          # batch samples per lane-row
CHUNK = 16          # sublane rows per inner-loop step (CHUNK * LANE = 2048 samples)


def _cdiv(a, b):
    return (a + b - 1) // b


def _round_up(n, m):
    return _cdiv(n, m) * m


def mlp_kernel(x_ref, w1_ref, b1_ref, w2_ref, b2_ref, w3_ref, b3_ref, o_ref):
    # x_ref: (IN_DIM, R, LANE) VMEM block; o_ref: (OUT_DIM, R, LANE) VMEM block.
    # w*_ref / b*_ref: tiny SMEM arrays (PyTorch (out, in) layout), read as scalars.
    rows = x_ref.shape[1]

    # Hoist every scalar weight/bias read out of the inner loop (one SMEM sld each).
    W1 = [[w1_ref[n, k] for k in range(IN_DIM)] for n in range(H1_DIM)]
    B1 = [b1_ref[n] for n in range(H1_DIM)]
    W2 = [[w2_ref[n, k] for k in range(H1_DIM)] for n in range(H2_DIM)]
    B2 = [b2_ref[n] for n in range(H2_DIM)]
    W3 = [[w3_ref[n, k] for k in range(H2_DIM)] for n in range(OUT_DIM)]
    B3 = [b3_ref[n] for n in range(OUT_DIM)]

    def body(c, carry):
        r0 = pl.multiple_of(c * CHUNK, CHUNK)
        xs = [x_ref[k, pl.ds(r0, CHUNK), :] for k in range(IN_DIM)]

        # Layer 1: (4 -> 8) + ReLU — scalar-FMA chains on full (CHUNK, 128) tiles.
        h1 = []
        for n in range(H1_DIM):
            acc = xs[0] * W1[n][0]
            for k in range(1, IN_DIM):
                acc = acc + xs[k] * W1[n][k]
            h1.append(jnp.maximum(acc + B1[n], 0.0))

        # Layer 2: (8 -> 4) + ReLU.
        h2 = []
        for n in range(H2_DIM):
            acc = h1[0] * W2[n][0]
            for k in range(1, H1_DIM):
                acc = acc + h1[k] * W2[n][k]
            h2.append(jnp.maximum(acc + B2[n], 0.0))

        # Layer 3: (4 -> 2) + Tanh (EUP) — lane-dense (CHUNK, 128) stores.
        for n in range(OUT_DIM):
            acc = h2[0] * W3[n][0]
            for k in range(1, H2_DIM):
                acc = acc + h2[k] * W3[n][k]
            o_ref[n, pl.ds(r0, CHUNK), :] = jnp.tanh(acc + B3[n]).astype(o_ref.dtype)
        return carry

    lax.fori_loop(0, rows // CHUNK, body, 0)


def mlp_forward(x, params, *, max_block_rows=256):
    """x: (B, 4) float32 -> (B, 2) float32."""
    w1, b1, w2, b2, w3, b3 = params
    B = x.shape[0]

    rows = max(_cdiv(B, LANE), 1)
    # Batch tile per grid step: big enough to amortize ~0.35us/step overhead, small enough
    # for v5e/v7x scoped VMEM, and chosen so larger batches give >= 2 grid steps.
    block_rows = max(CHUNK, min(max_block_rows, _round_up(_cdiv(rows, 2), CHUNK)))
    rows_pad = _round_up(rows, block_rows)
    b_pad = rows_pad * LANE

    x_p = jnp.pad(x, ((0, b_pad - B), (0, 0)))
    # Batch-on-lanes layout: (IN_DIM, rows_pad, LANE); sample s lives at (s//128, s%128).
    x_t = jnp.transpose(x_p.reshape(rows_pad, LANE, IN_DIM), (2, 0, 1))

    grid = (rows_pad // block_rows,)
    smem = pl.BlockSpec(memory_space=pltpu.MemorySpace.SMEM)

    out_t = pl.pallas_call(
        mlp_kernel,
        out_shape=jax.ShapeDtypeStruct((OUT_DIM, rows_pad, LANE), x.dtype),
        grid_spec=pltpu.PrefetchScalarGridSpec(
            num_scalar_prefetch=0,
            grid=grid,
            in_specs=[
                pl.BlockSpec((IN_DIM, block_rows, LANE), lambda i: (0, i, 0)),  # x block
                smem, smem,   # w1, b1  (whole, SMEM-resident)
                smem, smem,   # w2, b2
                smem, smem,   # w3, b3
            ],
            out_specs=pl.BlockSpec((OUT_DIM, block_rows, LANE), lambda i: (0, i, 0)),
        ),
        compiler_params=pltpu.CompilerParams(
            dimension_semantics=("parallel",),  # batch axis: megacore / v7x dual-TC
        ),
    )(x_t, w1, b1, w2, b2, w3, b3)

    # Back to (B, 2) outside the kernel; padded samples are dropped here.
    out = jnp.transpose(out_t, (1, 2, 0)).reshape(b_pad, OUT_DIM)
    return out[:B]


def init_params(key):
    """nn.Linear-style init U(-1/sqrt(fan_in), 1/sqrt(fan_in)); weights in (out, in) layout."""
    dims = [(IN_DIM, H1_DIM), (H1_DIM, H2_DIM), (H2_DIM, OUT_DIM)]
    params = []
    for i, (fan_in, fan_out) in enumerate(dims):
        kw, kb = jax.random.split(jax.random.fold_in(key, i))
        bound = 1.0 / jnp.sqrt(float(fan_in))
        w = jax.random.uniform(kw, (fan_out, fan_in), jnp.float32, -bound, bound)
        b = jax.random.uniform(kb, (fan_out,), jnp.float32, -bound, bound)
        params += [w, b]
    return tuple(params)


def reference_forward(x, params):
    w1, b1, w2, b2, w3, b3 = params
    h1 = jnp.maximum(x @ w1.T + b1, 0.0)
    h2 = jnp.maximum(h1 @ w2.T + b2, 0.0)
    return jnp.tanh(h2 @ w3.T + b3)


if __name__ == "__main__":
    key = jax.random.PRNGKey(0)
    k_x, k_p = jax.random.split(key)

    batch = 8
    x = jax.random.normal(k_x, (batch, IN_DIM), dtype=jnp.float32)
    params = init_params(k_p)

    out = mlp_forward(x, params)
    jax.block_until_ready(out)

    ref = reference_forward(x, params)
    assert out.shape == (batch, OUT_DIM), out.shape
    assert jnp.allclose(out, ref, atol=1e-4, rtol=1e-4), "mismatch vs reference"

    print("KERNEL_OK")
</pallas_src>

<mosaic_0001>
module attributes {stable_mosaic.version = 11 : i64} {
  func.func @mlp_kernel(%arg0: i32, %arg1: memref<4x16x128xf32, #tpu.memory_space<vmem>>, %arg2: memref<8x4xf32, #tpu.memory_space<smem>>, %arg3: memref<8xf32, #tpu.memory_space<smem>>, %arg4: memref<4x8xf32, #tpu.memory_space<smem>>, %arg5: memref<4xf32, #tpu.memory_space<smem>>, %arg6: memref<2x4xf32, #tpu.memory_space<smem>>, %arg7: memref<2xf32, #tpu.memory_space<smem>>, %arg8: memref<2x16x128xf32, #tpu.memory_space<vmem>>) attributes {dimension_semantics = [#tpu.dimension_semantics<parallel>], iteration_bounds = array<i64: 1>, scalar_prefetch = 0 : i64, scratch_operands = 0 : i64, tpu.core_type = #tpu.core_type<tc>, window_params = [{transform_indices = @transform_0, window_bounds = array<i64: 4, 16, 128>}, {transform_indices = @transform_1, window_bounds = array<i64: 8, 4>}, {transform_indices = @transform_2, window_bounds = array<i64: 8>}, {transform_indices = @transform_3, window_bounds = array<i64: 4, 8>}, {transform_indices = @transform_4, window_bounds = array<i64: 4>}, {transform_indices = @transform_5, window_bounds = array<i64: 2, 4>}, {transform_indices = @transform_6, window_bounds = array<i64: 2>}, {transform_indices = @transform_7, window_bounds = array<i64: 2, 16, 128>}]} {
    %c0 = arith.constant 0 : index
    %c0_0 = arith.constant 0 : index
    %0 = memref.load %arg2[%c0, %c0_0] : memref<8x4xf32, #tpu.memory_space<smem>>
    %c0_1 = arith.constant 0 : index
    %c1 = arith.constant 1 : index
    %1 = memref.load %arg2[%c0_1, %c1] : memref<8x4xf32, #tpu.memory_space<smem>>
    %c0_2 = arith.constant 0 : index
    %c2 = arith.constant 2 : index
    %2 = memref.load %arg2[%c0_2, %c2] : memref<8x4xf32, #tpu.memory_space<smem>>
    %c0_3 = arith.constant 0 : index
    %c3 = arith.constant 3 : index
    %3 = memref.load %arg2[%c0_3, %c3] : memref<8x4xf32, #tpu.memory_space<smem>>
    %c1_4 = arith.constant 1 : index
    %c0_5 = arith.constant 0 : index
    %4 = memref.load %arg2[%c1_4, %c0_5] : memref<8x4xf32, #tpu.memory_space<smem>>
    %c1_6 = arith.constant 1 : index
    %c1_7 = arith.constant 1 : index
    %5 = memref.load %arg2[%c1_6, %c1_7] : memref<8x4xf32, #tpu.memory_space<smem>>
    %c1_8 = arith.constant 1 : index
    %c2_9 = arith.constant 2 : index
    %6 = memref.load %arg2[%c1_8, %c2_9] : memref<8x4xf32, #tpu.memory_space<smem>>
    %c1_10 = arith.constant 1 : index
    %c3_11 = arith.constant 3 : index
    %7 = memref.load %arg2[%c1_10, %c3_11] : memref<8x4xf32, #tpu.memory_space<smem>>
    %c2_12 = arith.constant 2 : index
    %c0_13 = arith.constant 0 : index
    %8 = memref.load %arg2[%c2_12, %c0_13] : memref<8x4xf32, #tpu.memory_space<smem>>
    %c2_14 = arith.constant 2 : index
    %c1_15 = arith.constant 1 : index
    %9 = memref.load %arg2[%c2_14, %c1_15] : memref<8x4xf32, #tpu.memory_space<smem>>
    %c2_16 = arith.constant 2 : index
    %c2_17 = arith.constant 2 : index
    %10 = memref.load %arg2[%c2_16, %c2_17] : memref<8x4xf32, #tpu.memory_space<smem>>
    %c2_18 = arith.constant 2 : index
    %c3_19 = arith.constant 3 : index
    %11 = memref.load %arg2[%c2_18, %c3_19] : memref<8x4xf32, #tpu.memory_space<smem>>
    %c3_20 = arith.constant 3 : index
    %c0_21 = arith.constant 0 : index
    %12 = memref.load %arg2[%c3_20, %c0_21] : memref<8x4xf32, #tpu.memory_space<smem>>
    %c3_22 = arith.constant 3 : index
    %c1_23 = arith.constant 1 : index
    %13 = memref.load %arg2[%c3_22, %c1_23] : memref<8x4xf32, #tpu.memory_space<smem>>
    %c3_24 = arith.constant 3 : index
    %c2_25 = arith.constant 2 : index
    %14 = memref.load %arg2[%c3_24, %c2_25] : memref<8x4xf32, #tpu.memory_space<smem>>
    %c3_26 = arith.constant 3 : index
    %c3_27 = arith.constant 3 : index
    %15 = memref.load %arg2[%c3_26, %c3_27] : memref<8x4xf32, #tpu.memory_space<smem>>
    %c4 = arith.constant 4 : index
    %c0_28 = arith.constant 0 : index
    %16 = memref.load %arg2[%c4, %c0_28] : memref<8x4xf32, #tpu.memory_space<smem>>
    %c4_29 = arith.constant 4 : index
    %c1_30 = arith.constant 1 : index
    %17 = memref.load %arg2[%c4_29, %c1_30] : memref<8x4xf32, #tpu.memory_space<smem>>
    %c4_31 = arith.constant 4 : index
    %c2_32 = arith.constant 2 : index
    %18 = memref.load %arg2[%c4_31, %c2_32] : memref<8x4xf32, #tpu.memory_space<smem>>
    %c4_33 = arith.constant 4 : index
    %c3_34 = arith.constant 3 : index
    %19 = memref.load %arg2[%c4_33, %c3_34] : memref<8x4xf32, #tpu.memory_space<smem>>
    %c5 = arith.constant 5 : index
    %c0_35 = arith.constant 0 : index
    %20 = memref.load %arg2[%c5, %c0_35] : memref<8x4xf32, #tpu.memory_space<smem>>
    %c5_36 = arith.constant 5 : index
    %c1_37 = arith.constant 1 : index
    %21 = memref.load %arg2[%c5_36, %c1_37] : memref<8x4xf32, #tpu.memory_space<smem>>
    %c5_38 = arith.constant 5 : index
    %c2_39 = arith.constant 2 : index
    %22 = memref.load %arg2[%c5_38, %c2_39] : memref<8x4xf32, #tpu.memory_space<smem>>
    %c5_40 = arith.constant 5 : index
    %c3_41 = arith.constant 3 : index
    %23 = memref.load %arg2[%c5_40, %c3_41] : memref<8x4xf32, #tpu.memory_space<smem>>
    %c6 = arith.constant 6 : index
    %c0_42 = arith.constant 0 : index
    %24 = memref.load %arg2[%c6, %c0_42] : memref<8x4xf32, #tpu.memory_space<smem>>
    %c6_43 = arith.constant 6 : index
    %c1_44 = arith.constant 1 : index
    %25 = memref.load %arg2[%c6_43, %c1_44] : memref<8x4xf32, #tpu.memory_space<smem>>
    %c6_45 = arith.constant 6 : index
    %c2_46 = arith.constant 2 : index
    %26 = memref.load %arg2[%c6_45, %c2_46] : memref<8x4xf32, #tpu.memory_space<smem>>
    %c6_47 = arith.constant 6 : index
    %c3_48 = arith.constant 3 : index
    %27 = memref.load %arg2[%c6_47, %c3_48] : memref<8x4xf32, #tpu.memory_space<smem>>
    %c7 = arith.constant 7 : index
    %c0_49 = arith.constant 0 : index
    %28 = memref.load %arg2[%c7, %c0_49] : memref<8x4xf32, #tpu.memory_space<smem>>
    %c7_50 = arith.constant 7 : index
    %c1_51 = arith.constant 1 : index
    %29 = memref.load %arg2[%c7_50, %c1_51] : memref<8x4xf32, #tpu.memory_space<smem>>
    %c7_52 = arith.constant 7 : index
    %c2_53 = arith.constant 2 : index
    %30 = memref.load %arg2[%c7_52, %c2_53] : memref<8x4xf32, #tpu.memory_space<smem>>
    %c7_54 = arith.constant 7 : index
    %c3_55 = arith.constant 3 : index
    %31 = memref.load %arg2[%c7_54, %c3_55] : memref<8x4xf32, #tpu.memory_space<smem>>
    %c0_56 = arith.constant 0 : index
    %32 = memref.load %arg3[%c0_56] : memref<8xf32, #tpu.memory_space<smem>>
    %c1_57 = arith.constant 1 : index
    %33 = memref.load %arg3[%c1_57] : memref<8xf32, #tpu.memory_space<smem>>
    %c2_58 = arith.constant 2 : index
    %34 = memref.load %arg3[%c2_58] : memref<8xf32, #tpu.memory_space<smem>>
    %c3_59 = arith.constant 3 : index
    %35 = memref.load %arg3[%c3_59] : memref<8xf32, #tpu.memory_space<smem>>
    %c4_60 = arith.constant 4 : index
    %36 = memref.load %arg3[%c4_60] : memref<8xf32, #tpu.memory_space<smem>>
    %c5_61 = arith.constant 5 : index
    %37 = memref.load %arg3[%c5_61] : memref<8xf32, #tpu.memory_space<smem>>
    %c6_62 = arith.constant 6 : index
    %38 = memref.load %arg3[%c6_62] : memref<8xf32, #tpu.memory_space<smem>>
    %c7_63 = arith.constant 7 : index
    %39 = memref.load %arg3[%c7_63] : memref<8xf32, #tpu.memory_space<smem>>
    %c0_64 = arith.constant 0 : index
    %c0_65 = arith.constant 0 : index
    %40 = memref.load %arg4[%c0_64, %c0_65] : memref<4x8xf32, #tpu.memory_space<smem>>
    %c0_66 = arith.constant 0 : index
    %c1_67 = arith.constant 1 : index
    %41 = memref.load %arg4[%c0_66, %c1_67] : memref<4x8xf32, #tpu.memory_space<smem>>
    %c0_68 = arith.constant 0 : index
    %c2_69 = arith.constant 2 : index
    %42 = memref.load %arg4[%c0_68, %c2_69] : memref<4x8xf32, #tpu.memory_space<smem>>
    %c0_70 = arith.constant 0 : index
    %c3_71 = arith.constant 3 : index
    %43 = memref.load %arg4[%c0_70, %c3_71] : memref<4x8xf32, #tpu.memory_space<smem>>
    %c0_72 = arith.constant 0 : index
    %c4_73 = arith.constant 4 : index
    %44 = memref.load %arg4[%c0_72, %c4_73] : memref<4x8xf32, #tpu.memory_space<smem>>
    %c0_74 = arith.constant 0 : index
    %c5_75 = arith.constant 5 : index
    %45 = memref.load %arg4[%c0_74, %c5_75] : memref<4x8xf32, #tpu.memory_space<smem>>
    %c0_76 = arith.constant 0 : index
    %c6_77 = arith.constant 6 : index
    %46 = memref.load %arg4[%c0_76, %c6_77] : memref<4x8xf32, #tpu.memory_space<smem>>
    %c0_78 = arith.constant 0 : index
    %c7_79 = arith.constant 7 : index
    %47 = memref.load %arg4[%c0_78, %c7_79] : memref<4x8xf32, #tpu.memory_space<smem>>
    %c1_80 = arith.constant 1 : index
    %c0_81 = arith.constant 0 : index
    %48 = memref.load %arg4[%c1_80, %c0_81] : memref<4x8xf32, #tpu.memory_space<smem>>
    %c1_82 = arith.constant 1 : index
    %c1_83 = arith.constant 1 : index
    %49 = memref.load %arg4[%c1_82, %c1_83] : memref<4x8xf32, #tpu.memory_space<smem>>
    %c1_84 = arith.constant 1 : index
    %c2_85 = arith.constant 2 : index
    %50 = memref.load %arg4[%c1_84, %c2_85] : memref<4x8xf32, #tpu.memory_space<smem>>
    %c1_86 = arith.constant 1 : index
    %c3_87 = arith.constant 3 : index
    %51 = memref.load %arg4[%c1_86, %c3_87] : memref<4x8xf32, #tpu.memory_space<smem>>
    %c1_88 = arith.constant 1 : index
    %c4_89 = arith.constant 4 : index
    %52 = memref.load %arg4[%c1_88, %c4_89] : memref<4x8xf32, #tpu.memory_space<smem>>
    %c1_90 = arith.constant 1 : index
    %c5_91 = arith.constant 5 : index
    %53 = memref.load %arg4[%c1_90, %c5_91] : memref<4x8xf32, #tpu.memory_space<smem>>
    %c1_92 = arith.constant 1 : index
    %c6_93 = arith.constant 6 : index
    %54 = memref.load %arg4[%c1_92, %c6_93] : memref<4x8xf32, #tpu.memory_space<smem>>
    %c1_94 = arith.constant 1 : index
    %c7_95 = arith.constant 7 : index
    %55 = memref.load %arg4[%c1_94, %c7_95] : memref<4x8xf32, #tpu.memory_space<smem>>
    %c2_96 = arith.constant 2 : index
    %c0_97 = arith.constant 0 : index
    %56 = memref.load %arg4[%c2_96, %c0_97] : memref<4x8xf32, #tpu.memory_space<smem>>
    %c2_98 = arith.constant 2 : index
    %c1_99 = arith.constant 1 : index
    %57 = memref.load %arg4[%c2_98, %c1_99] : memref<4x8xf32, #tpu.memory_space<smem>>
    %c2_100 = arith.constant 2 : index
    %c2_101 = arith.constant 2 : index
    %58 = memref.load %arg4[%c2_100, %c2_101] : memref<4x8xf32, #tpu.memory_space<smem>>
    %c2_102 = arith.constant 2 : index
    %c3_103 = arith.constant 3 : index
    %59 = memref.load %arg4[%c2_102, %c3_103] : memref<4x8xf32, #tpu.memory_space<smem>>
    %c2_104 = arith.constant 2 : index
    %c4_105 = arith.constant 4 : index
    %60 = memref.load %arg4[%c2_104, %c4_105] : memref<4x8xf32, #tpu.memory_space<smem>>
    %c2_106 = arith.constant 2 : index
    %c5_107 = arith.constant 5 : index
    %61 = memref.load %arg4[%c2_106, %c5_107] : memref<4x8xf32, #tpu.memory_space<smem>>
    %c2_108 = arith.constant 2 : index
    %c6_109 = arith.constant 6 : index
    %62 = memref.load %arg4[%c2_108, %c6_109] : memref<4x8xf32, #tpu.memory_space<smem>>
    %c2_110 = arith.constant 2 : index
    %c7_111 = arith.constant 7 : index
    %63 = memref.load %arg4[%c2_110, %c7_111] : memref<4x8xf32, #tpu.memory_space<smem>>
    %c3_112 = arith.constant 3 : index
    %c0_113 = arith.constant 0 : index
    %64 = memref.load %arg4[%c3_112, %c0_113] : memref<4x8xf32, #tpu.memory_space<smem>>
    %c3_114 = arith.constant 3 : index
    %c1_115 = arith.constant 1 : index
    %65 = memref.load %arg4[%c3_114, %c1_115] : memref<4x8xf32, #tpu.memory_space<smem>>
    %c3_116 = arith.constant 3 : index
    %c2_117 = arith.constant 2 : index
    %66 = memref.load %arg4[%c3_116, %c2_117] : memref<4x8xf32, #tpu.memory_space<smem>>
    %c3_118 = arith.constant 3 : index
    %c3_119 = arith.constant 3 : index
    %67 = memref.load %arg4[%c3_118, %c3_119] : memref<4x8xf32, #tpu.memory_space<smem>>
    %c3_120 = arith.constant 3 : index
    %c4_121 = arith.constant 4 : index
    %68 = memref.load %arg4[%c3_120, %c4_121] : memref<4x8xf32, #tpu.memory_space<smem>>
    %c3_122 = arith.constant 3 : index
    %c5_123 = arith.constant 5 : index
    %69 = memref.load %arg4[%c3_122, %c5_123] : memref<4x8xf32, #tpu.memory_space<smem>>
    %c3_124 = arith.constant 3 : index
    %c6_125 = arith.constant 6 : index
    %70 = memref.load %arg4[%c3_124, %c6_125] : memref<4x8xf32, #tpu.memory_space<smem>>
    %c3_126 = arith.constant 3 : index
    %c7_127 = arith.constant 7 : index
    %71 = memref.load %arg4[%c3_126, %c7_127] : memref<4x8xf32, #tpu.memory_space<smem>>
    %c0_128 = arith.constant 0 : index
    %72 = memref.load %arg5[%c0_128] : memref<4xf32, #tpu.memory_space<smem>>
    %c1_129 = arith.constant 1 : index
    %73 = memref.load %arg5[%c1_129] : memref<4xf32, #tpu.memory_space<smem>>
    %c2_130 = arith.constant 2 : index
    %74 = memref.load %arg5[%c2_130] : memref<4xf32, #tpu.memory_space<smem>>
    %c3_131 = arith.constant 3 : index
    %75 = memref.load %arg5[%c3_131] : memref<4xf32, #tpu.memory_space<smem>>
    %c0_132 = arith.constant 0 : index
    %c0_133 = arith.constant 0 : index
    %76 = memref.load %arg6[%c0_132, %c0_133] : memref<2x4xf32, #tpu.memory_space<smem>>
    %c0_134 = arith.constant 0 : index
    %c1_135 = arith.constant 1 : index
    %77 = memref.load %arg6[%c0_134, %c1_135] : memref<2x4xf32, #tpu.memory_space<smem>>
    %c0_136 = arith.constant 0 : index
    %c2_137 = arith.constant 2 : index
    %78 = memref.load %arg6[%c0_136, %c2_137] : memref<2x4xf32, #tpu.memory_space<smem>>
    %c0_138 = arith.constant 0 : index
    %c3_139 = arith.constant 3 : index
    %79 = memref.load %arg6[%c0_138, %c3_139] : memref<2x4xf32, #tpu.memory_space<smem>>
    %c1_140 = arith.constant 1 : index
    %c0_141 = arith.constant 0 : index
    %80 = memref.load %arg6[%c1_140, %c0_141] : memref<2x4xf32, #tpu.memory_space<smem>>
    %c1_142 = arith.constant 1 : index
    %c1_143 = arith.constant 1 : index
    %81 = memref.load %arg6[%c1_142, %c1_143] : memref<2x4xf32, #tpu.memory_space<smem>>
    %c1_144 = arith.constant 1 : index
    %c2_145 = arith.constant 2 : index
    %82 = memref.load %arg6[%c1_144, %c2_145] : memref<2x4xf32, #tpu.memory_space<smem>>
    %c1_146 = arith.constant 1 : index
    %c3_147 = arith.constant 3 : index
    %83 = memref.load %arg6[%c1_146, %c3_147] : memref<2x4xf32, #tpu.memory_space<smem>>
    %c0_148 = arith.constant 0 : index
    %84 = memref.load %arg7[%c0_148] : memref<2xf32, #tpu.memory_space<smem>>
    %c1_149 = arith.constant 1 : index
    %85 = memref.load %arg7[%c1_149] : memref<2xf32, #tpu.memory_space<smem>>
    %c0_i32 = arith.constant 0 : i32
    %c16_i32 = arith.constant 16 : i32
    %86 = arith.muli %c0_i32, %c16_i32 : i32
    %87 = tpu.assume_multiple %86, 16 : i32
    %c0_150 = arith.constant 0 : index
    %88 = arith.index_cast %87 : i32 to index
    %c0_151 = arith.constant 0 : index
    %89 = vector.load %arg1[%c0_150, %88, %c0_151] : memref<4x16x128xf32, #tpu.memory_space<vmem>>, vector<1x16x128xf32>
    %90 = vector.shape_cast %89 : vector<1x16x128xf32> to vector<16x128xf32>
    %c1_152 = arith.constant 1 : index
    %91 = arith.index_cast %87 : i32 to index
    %c0_153 = arith.constant 0 : index
    %92 = vector.load %arg1[%c1_152, %91, %c0_153] : memref<4x16x128xf32, #tpu.memory_space<vmem>>, vector<1x16x128xf32>
    %93 = vector.shape_cast %92 : vector<1x16x128xf32> to vector<16x128xf32>
    %c2_154 = arith.constant 2 : index
    %94 = arith.index_cast %87 : i32 to index
    %c0_155 = arith.constant 0 : index
    %95 = vector.load %arg1[%c2_154, %94, %c0_155] : memref<4x16x128xf32, #tpu.memory_space<vmem>>, vector<1x16x128xf32>
    %96 = vector.shape_cast %95 : vector<1x16x128xf32> to vector<16x128xf32>
    %c3_156 = arith.constant 3 : index
    %97 = arith.index_cast %87 : i32 to index
    %c0_157 = arith.constant 0 : index
    %98 = vector.load %arg1[%c3_156, %97, %c0_157] : memref<4x16x128xf32, #tpu.memory_space<vmem>>, vector<1x16x128xf32>
    %99 = vector.shape_cast %98 : vector<1x16x128xf32> to vector<16x128xf32>
    %100 = vector.broadcast %0 : f32 to vector<16x128xf32>
    %101 = arith.mulf %90, %100 : vector<16x128xf32>
    %102 = vector.broadcast %1 : f32 to vector<16x128xf32>
    %103 = arith.mulf %93, %102 : vector<16x128xf32>
    %104 = arith.addf %101, %103 : vector<16x128xf32>
    %105 = vector.broadcast %2 : f32 to vector<16x128xf32>
    %106 = arith.mulf %96, %105 : vector<16x128xf32>
    %107 = arith.addf %104, %106 : vector<16x128xf32>
    %108 = vector.broadcast %3 : f32 to vector<16x128xf32>
    %109 = arith.mulf %99, %108 : vector<16x128xf32>
    %110 = arith.addf %107, %109 : vector<16x128xf32>
    %111 = vector.broadcast %32 : f32 to vector<16x128xf32>
    %112 = arith.addf %110, %111 : vector<16x128xf32>
    %cst = arith.constant 0.000000e+00 : f32
    %113 = vector.broadcast %cst : f32 to vector<16x128xf32>
    %114 = arith.maximumf %112, %113 : vector<16x128xf32>
    %115 = vector.broadcast %4 : f32 to vector<16x128xf32>
    %116 = arith.mulf %90, %115 : vector<16x128xf32>
    %117 = vector.broadcast %5 : f32 to vector<16x128xf32>
    %118 = arith.mulf %93, %117 : vector<16x128xf32>
    %119 = arith.addf %116, %118 : vector<16x128xf32>
    %120 = vector.broadcast %6 : f32 to vector<16x128xf32>
    %121 = arith.mulf %96, %120 : vector<16x128xf32>
    %122 = arith.addf %119, %121 : vector<16x128xf32>
    %123 = vector.broadcast %7 : f32 to vector<16x128xf32>
    %124 = arith.mulf %99, %123 : vector<16x128xf32>
    %125 = arith.addf %122, %124 : vector<16x128xf32>
    %126 = vector.broadcast %33 : f32 to vector<16x128xf32>
    %127 = arith.addf %125, %126 : vector<16x128xf32>
    %cst_158 = arith.constant 0.000000e+00 : f32
    %128 = vector.broadcast %cst_158 : f32 to vector<16x128xf32>
    %129 = arith.maximumf %127, %128 : vector<16x128xf32>
    %130 = vector.broadcast %8 : f32 to vector<16x128xf32>
    %131 = arith.mulf %90, %130 : vector<16x128xf32>
    %132 = vector.broadcast %9 : f32 to vector<16x128xf32>
    %133 = arith.mulf %93, %132 : vector<16x128xf32>
    %134 = arith.addf %131, %133 : vector<16x128xf32>
    %135 = vector.broadcast %10 : f32 to vector<16x128xf32>
    %136 = arith.mulf %96, %135 : vector<16x128xf32>
    %137 = arith.addf %134, %136 : vector<16x128xf32>
    %138 = vector.broadcast %11 : f32 to vector<16x128xf32>
    %139 = arith.mulf %99, %138 : vector<16x128xf32>
    %140 = arith.addf %137, %139 : vector<16x128xf32>
    %141 = vector.broadcast %34 : f32 to vector<16x128xf32>
    %142 = arith.addf %140, %141 : vector<16x128xf32>
    %cst_159 = arith.constant 0.000000e+00 : f32
    %143 = vector.broadcast %cst_159 : f32 to vector<16x128xf32>
    %144 = arith.maximumf %142, %143 : vector<16x128xf32>
    %145 = vector.broadcast %12 : f32 to vector<16x128xf32>
    %146 = arith.mulf %90, %145 : vector<16x128xf32>
    %147 = vector.broadcast %13 : f32 to vector<16x128xf32>
    %148 = arith.mulf %93, %147 : vector<16x128xf32>
    %149 = arith.addf %146, %148 : vector<16x128xf32>
    %150 = vector.broadcast %14 : f32 to vector<16x128xf32>
    %151 = arith.mulf %96, %150 : vector<16x128xf32>
    %152 = arith.addf %149, %151 : vector<16x128xf32>
    %153 = vector.broadcast %15 : f32 to vector<16x128xf32>
    %154 = arith.mulf %99, %153 : vector<16x128xf32>
    %155 = arith.addf %152, %154 : vector<16x128xf32>
    %156 = vector.broadcast %35 : f32 to vector<16x128xf32>
    %157 = arith.addf %155, %156 : vector<16x128xf32>
    %cst_160 = arith.constant 0.000000e+00 : f32
    %158 = vector.broadcast %cst_160 : f32 to vector<16x128xf32>
    %159 = arith.maximumf %157, %158 : vector<16x128xf32>
    %160 = vector.broadcast %16 : f32 to vector<16x128xf32>
    %161 = arith.mulf %90, %160 : vector<16x128xf32>
    %162 = vector.broadcast %17 : f32 to vector<16x128xf32>
    %163 = arith.mulf %93, %162 : vector<16x128xf32>
    %164 = arith.addf %161, %163 : vector<16x128xf32>
    %165 = vector.broadcast %18 : f32 to vector<16x128xf32>
    %166 = arith.mulf %96, %165 : vector<16x128xf32>
    %167 = arith.addf %164, %166 : vector<16x128xf32>
    %168 = vector.broadcast %19 : f32 to vector<16x128xf32>
    %169 = arith.mulf %99, %168 : vector<16x128xf32>
    %170 = arith.addf %167, %169 : vector<16x128xf32>
    %171 = vector.broadcast %36 : f32 to vector<16x128xf32>
    %172 = arith.addf %170, %171 : vector<16x128xf32>
    %cst_161 = arith.constant 0.000000e+00 : f32
    %173 = vector.broadcast %cst_161 : f32 to vector<16x128xf32>
    %174 = arith.maximumf %172, %173 : vector<16x128xf32>
    %175 = vector.broadcast %20 : f32 to vector<16x128xf32>
    %176 = arith.mulf %90, %175 : vector<16x128xf32>
    %177 = vector.broadcast %21 : f32 to vector<16x128xf32>
    %178 = arith.mulf %93, %177 : vector<16x128xf32>
    %179 = arith.addf %176, %178 : vector<16x128xf32>
    %180 = vector.broadcast %22 : f32 to vector<16x128xf32>
    %181 = arith.mulf %96, %180 : vector<16x128xf32>
    %182 = arith.addf %179, %181 : vector<16x128xf32>
    %183 = vector.broadcast %23 : f32 to vector<16x128xf32>
    %184 = arith.mulf %99, %183 : vector<16x128xf32>
    %185 = arith.addf %182, %184 : vector<16x128xf32>
    %186 = vector.broadcast %37 : f32 to vector<16x128xf32>
    %187 = arith.addf %185, %186 : vector<16x128xf32>
    %cst_162 = arith.constant 0.000000e+00 : f32
    %188 = vector.broadcast %cst_162 : f32 to vector<16x128xf32>
    %189 = arith.maximumf %187, %188 : vector<16x128xf32>
    %190 = vector.broadcast %24 : f32 to vector<16x128xf32>
    %191 = arith.mulf %90, %190 : vector<16x128xf32>
    %192 = vector.broadcast %25 : f32 to vector<16x128xf32>
    %193 = arith.mulf %93, %192 : vector<16x128xf32>
    %194 = arith.addf %191, %193 : vector<16x128xf32>
    %195 = vector.broadcast %26 : f32 to vector<16x128xf32>
    %196 = arith.mulf %96, %195 : vector<16x128xf32>
    %197 = arith.addf %194, %196 : vector<16x128xf32>
    %198 = vector.broadcast %27 : f32 to vector<16x128xf32>
    %199 = arith.mulf %99, %198 : vector<16x128xf32>
    %200 = arith.addf %197, %199 : vector<16x128xf32>
    %201 = vector.broadcast %38 : f32 to vector<16x128xf32>
    %202 = arith.addf %200, %201 : vector<16x128xf32>
    %cst_163 = arith.constant 0.000000e+00 : f32
    %203 = vector.broadcast %cst_163 : f32 to vector<16x128xf32>
    %204 = arith.maximumf %202, %203 : vector<16x128xf32>
    %205 = vector.broadcast %28 : f32 to vector<16x128xf32>
    %206 = arith.mulf %90, %205 : vector<16x128xf32>
    %207 = vector.broadcast %29 : f32 to vector<16x128xf32>
    %208 = arith.mulf %93, %207 : vector<16x128xf32>
    %209 = arith.addf %206, %208 : vector<16x128xf32>
    %210 = vector.broadcast %30 : f32 to vector<16x128xf32>
    %211 = arith.mulf %96, %210 : vector<16x128xf32>
    %212 = arith.addf %209, %211 : vector<16x128xf32>
    %213 = vector.broadcast %31 : f32 to vector<16x128xf32>
    %214 = arith.mulf %99, %213 : vector<16x128xf32>
    %215 = arith.addf %212, %214 : vector<16x128xf32>
    %216 = vector.broadcast %39 : f32 to vector<16x128xf32>
    %217 = arith.addf %215, %216 : vector<16x128xf32>
    %cst_164 = arith.constant 0.000000e+00 : f32
    %218 = vector.broadcast %cst_164 : f32 to vector<16x128xf32>
    %219 = arith.maximumf %217, %218 : vector<16x128xf32>
    %220 = vector.broadcast %40 : f32 to vector<16x128xf32>
    %221 = arith.mulf %114, %220 : vector<16x128xf32>
    %222 = vector.broadcast %41 : f32 to vector<16x128xf32>
    %223 = arith.mulf %129, %222 : vector<16x128xf32>
    %224 = arith.addf %221, %223 : vector<16x128xf32>
    %225 = vector.broadcast %42 : f32 to vector<16x128xf32>
    %226 = arith.mulf %144, %225 : vector<16x128xf32>
    %227 = arith.addf %224, %226 : vector<16x128xf32>
    %228 = vector.broadcast %43 : f32 to vector<16x128xf32>
    %229 = arith.mulf %159, %228 : vector<16x128xf32>
    %230 = arith.addf %227, %229 : vector<16x128xf32>
    %231 = vector.broadcast %44 : f32 to vector<16x128xf32>
    %232 = arith.mulf %174, %231 : vector<16x128xf32>
    %233 = arith.addf %230, %232 : vector<16x128xf32>
    %234 = vector.broadcast %45 : f32 to vector<16x128xf32>
    %235 = arith.mulf %189, %234 : vector<16x128xf32>
    %236 = arith.addf %233, %235 : vector<16x128xf32>
    %237 = vector.broadcast %46 : f32 to vector<16x128xf32>
    %238 = arith.mulf %204, %237 : vector<16x128xf32>
    %239 = arith.addf %236, %238 : vector<16x128xf32>
    %240 = vector.broadcast %47 : f32 to vector<16x128xf32>
    %241 = arith.mulf %219, %240 : vector<16x128xf32>
    %242 = arith.addf %239, %241 : vector<16x128xf32>
    %243 = vector.broadcast %72 : f32 to vector<16x128xf32>
    %244 = arith.addf %242, %243 : vector<16x128xf32>
    %cst_165 = arith.constant 0.000000e+00 : f32
    %245 = vector.broadcast %cst_165 : f32 to vector<16x128xf32>
    %246 = arith.maximumf %244, %245 : vector<16x128xf32>
    %247 = vector.broadcast %48 : f32 to vector<16x128xf32>
    %248 = arith.mulf %114, %247 : vector<16x128xf32>
    %249 = vector.broadcast %49 : f32 to vector<16x128xf32>
    %250 = arith.mulf %129, %249 : vector<16x128xf32>
    %251 = arith.addf %248, %250 : vector<16x128xf32>
    %252 = vector.broadcast %50 : f32 to vector<16x128xf32>
    %253 = arith.mulf %144, %252 : vector<16x128xf32>
    %254 = arith.addf %251, %253 : vector<16x128xf32>
    %255 = vector.broadcast %51 : f32 to vector<16x128xf32>
    %256 = arith.mulf %159, %255 : vector<16x128xf32>
    %257 = arith.addf %254, %256 : vector<16x128xf32>
    %258 = vector.broadcast %52 : f32 to vector<16x128xf32>
    %259 = arith.mulf %174, %258 : vector<16x128xf32>
    %260 = arith.addf %257, %259 : vector<16x128xf32>
    %261 = vector.broadcast %53 : f32 to vector<16x128xf32>
    %262 = arith.mulf %189, %261 : vector<16x128xf32>
    %263 = arith.addf %260, %262 : vector<16x128xf32>
    %264 = vector.broadcast %54 : f32 to vector<16x128xf32>
    %265 = arith.mulf %204, %264 : vector<16x128xf32>
    %266 = arith.addf %263, %265 : vector<16x128xf32>
    %267 = vector.broadcast %55 : f32 to vector<16x128xf32>
    %268 = arith.mulf %219, %267 : vector<16x128xf32>
    %269 = arith.addf %266, %268 : vector<16x128xf32>
    %270 = vector.broadcast %73 : f32 to vector<16x128xf32>
    %271 = arith.addf %269, %270 : vector<16x128xf32>
    %cst_166 = arith.constant 0.000000e+00 : f32
    %272 = vector.broadcast %cst_166 : f32 to vector<16x128xf32>
    %273 = arith.maximumf %271, %272 : vector<16x128xf32>
    %274 = vector.broadcast %56 : f32 to vector<16x128xf32>
    %275 = arith.mulf %114, %274 : vector<16x128xf32>
    %276 = vector.broadcast %57 : f32 to vector<16x128xf32>
    %277 = arith.mulf %129, %276 : vector<16x128xf32>
    %278 = arith.addf %275, %277 : vector<16x128xf32>
    %279 = vector.broadcast %58 : f32 to vector<16x128xf32>
    %280 = arith.mulf %144, %279 : vector<16x128xf32>
    %281 = arith.addf %278, %280 : vector<16x128xf32>
    %282 = vector.broadcast %59 : f32 to vector<16x128xf32>
    %283 = arith.mulf %159, %282 : vector<16x128xf32>
    %284 = arith.addf %281, %283 : vector<16x128xf32>
    %285 = vector.broadcast %60 : f32 to vector<16x128xf32>
    %286 = arith.mulf %174, %285 : vector<16x128xf32>
    %287 = arith.addf %284, %286 : vector<16x128xf32>
    %288 = vector.broadcast %61 : f32 to vector<16x128xf32>
    %289 = arith.mulf %189, %288 : vector<16x128xf32>
    %290 = arith.addf %287, %289 : vector<16x128xf32>
    %291 = vector.broadcast %62 : f32 to vector<16x128xf32>
    %292 = arith.mulf %204, %291 : vector<16x128xf32>
    %293 = arith.addf %290, %292 : vector<16x128xf32>
    %294 = vector.broadcast %63 : f32 to vector<16x128xf32>
    %295 = arith.mulf %219, %294 : vector<16x128xf32>
    %296 = arith.addf %293, %295 : vector<16x128xf32>
    %297 = vector.broadcast %74 : f32 to vector<16x128xf32>
    %298 = arith.addf %296, %297 : vector<16x128xf32>
    %cst_167 = arith.constant 0.000000e+00 : f32
    %299 = vector.broadcast %cst_167 : f32 to vector<16x128xf32>
    %300 = arith.maximumf %298, %299 : vector<16x128xf32>
    %301 = vector.broadcast %64 : f32 to vector<16x128xf32>
    %302 = arith.mulf %114, %301 : vector<16x128xf32>
    %303 = vector.broadcast %65 : f32 to vector<16x128xf32>
    %304 = arith.mulf %129, %303 : vector<16x128xf32>
    %305 = arith.addf %302, %304 : vector<16x128xf32>
    %306 = vector.broadcast %66 : f32 to vector<16x128xf32>
    %307 = arith.mulf %144, %306 : vector<16x128xf32>
    %308 = arith.addf %305, %307 : vector<16x128xf32>
    %309 = vector.broadcast %67 : f32 to vector<16x128xf32>
    %310 = arith.mulf %159, %309 : vector<16x128xf32>
    %311 = arith.addf %308, %310 : vector<16x128xf32>
    %312 = vector.broadcast %68 : f32 to vector<16x128xf32>
    %313 = arith.mulf %174, %312 : vector<16x128xf32>
    %314 = arith.addf %311, %313 : vector<16x128xf32>
    %315 = vector.broadcast %69 : f32 to vector<16x128xf32>
    %316 = arith.mulf %189, %315 : vector<16x128xf32>
    %317 = arith.addf %314, %316 : vector<16x128xf32>
    %318 = vector.broadcast %70 : f32 to vector<16x128xf32>
    %319 = arith.mulf %204, %318 : vector<16x128xf32>
    %320 = arith.addf %317, %319 : vector<16x128xf32>
    %321 = vector.broadcast %71 : f32 to vector<16x128xf32>
    %322 = arith.mulf %219, %321 : vector<16x128xf32>
    %323 = arith.addf %320, %322 : vector<16x128xf32>
    %324 = vector.broadcast %75 : f32 to vector<16x128xf32>
    %325 = arith.addf %323, %324 : vector<16x128xf32>
    %cst_168 = arith.constant 0.000000e+00 : f32
    %326 = vector.broadcast %cst_168 : f32 to vector<16x128xf32>
    %327 = arith.maximumf %325, %326 : vector<16x128xf32>
    %328 = vector.broadcast %76 : f32 to vector<16x128xf32>
    %329 = arith.mulf %246, %328 : vector<16x128xf32>
    %330 = vector.broadcast %77 : f32 to vector<16x128xf32>
    %331 = arith.mulf %273, %330 : vector<16x128xf32>
    %332 = arith.addf %329, %331 : vector<16x128xf32>
    %333 = vector.broadcast %78 : f32 to vector<16x128xf32>
    %334 = arith.mulf %300, %333 : vector<16x128xf32>
    %335 = arith.addf %332, %334 : vector<16x128xf32>
    %336 = vector.broadcast %79 : f32 to vector<16x128xf32>
    %337 = arith.mulf %327, %336 : vector<16x128xf32>
    %338 = arith.addf %335, %337 : vector<16x128xf32>
    %339 = vector.broadcast %84 : f32 to vector<16x128xf32>
    %340 = arith.addf %338, %339 : vector<16x128xf32>
    %341 = math.tanh %340 : vector<16x128xf32>
    %c0_169 = arith.constant 0 : index
    %342 = arith.index_cast %87 : i32 to index
    %c0_170 = arith.constant 0 : index
    %343 = vector.load %arg8[%c0_169, %342, %c0_170] : memref<2x16x128xf32, #tpu.memory_space<vmem>>, vector<1x16x128xf32>
    %344 = vector.shape_cast %343 : vector<1x16x128xf32> to vector<16x128xf32>
    %345 = vector.shape_cast %341 : vector<16x128xf32> to vector<1x16x128xf32>
    tpu.vector_store %arg8[%c0_169, %342, %c0_170], %345 {strides = array<i32>} : memref<2x16x128xf32, #tpu.memory_space<vmem>>, vector<1x16x128xf32>,
    %346 = vector.broadcast %80 : f32 to vector<16x128xf32>
    %347 = arith.mulf %246, %346 : vector<16x128xf32>
    %348 = vector.broadcast %81 : f32 to vector<16x128xf32>
    %349 = arith.mulf %273, %348 : vector<16x128xf32>
    %350 = arith.addf %347, %349 : vector<16x128xf32>
    %351 = vector.broadcast %82 : f32 to vector<16x128xf32>
    %352 = arith.mulf %300, %351 : vector<16x128xf32>
    %353 = arith.addf %350, %352 : vector<16x128xf32>
    %354 = vector.broadcast %83 : f32 to vector<16x128xf32>
    %355 = arith.mulf %327, %354 : vector<16x128xf32>
    %356 = arith.addf %353, %355 : vector<16x128xf32>
    %357 = vector.broadcast %85 : f32 to vector<16x128xf32>
    %358 = arith.addf %356, %357 : vector<16x128xf32>
    %359 = math.tanh %358 : vector<16x128xf32>
    %c1_171 = arith.constant 1 : index
    %360 = arith.index_cast %87 : i32 to index
    %c0_172 = arith.constant 0 : index
    %361 = vector.load %arg8[%c1_171, %360, %c0_172] : memref<2x16x128xf32, #tpu.memory_space<vmem>>, vector<1x16x128xf32>
    %362 = vector.shape_cast %361 : vector<1x16x128xf32> to vector<16x128xf32>
    %363 = vector.shape_cast %359 : vector<16x128xf32> to vector<1x16x128xf32>
    tpu.vector_store %arg8[%c1_171, %360, %c0_172], %363 {strides = array<i32>} : memref<2x16x128xf32, #tpu.memory_space<vmem>>, vector<1x16x128xf32>,
    %c1_i32 = arith.constant 1 : i32
    return
  }
  func.func @transform_0(%arg0: i32) -> (i32, i32, i32) {
    %c0_i32 = arith.constant 0 : i32
    %c0_i32_0 = arith.constant 0 : i32
    %c0_i32_1 = arith.constant 0 : i32
    return %c0_i32, %arg0, %c0_i32_0 : i32, i32, i32
  }
  func.func @transform_1(%arg0: i32) -> (i32, i32) {
    %c0_i32 = arith.constant 0 : i32
    %c0_i32_0 = arith.constant 0 : i32
    %c0_i32_1 = arith.constant 0 : i32
    return %c0_i32, %c0_i32_0 : i32, i32
  }
  func.func @transform_2(%arg0: i32) -> i32 {
    %c0_i32 = arith.constant 0 : i32
    %c0_i32_0 = arith.constant 0 : i32
    return %c0_i32 : i32
  }
  func.func @transform_3(%arg0: i32) -> (i32, i32) {
    %c0_i32 = arith.constant 0 : i32
    %c0_i32_0 = arith.constant 0 : i32
    %c0_i32_1 = arith.constant 0 : i32
    return %c0_i32, %c0_i32_0 : i32, i32
  }
  func.func @transform_4(%arg0: i32) -> i32 {
    %c0_i32 = arith.constant 0 : i32
    %c0_i32_0 = arith.constant 0 : i32
    return %c0_i32 : i32
  }
  func.func @transform_5(%arg0: i32) -> (i32, i32) {
    %c0_i32 = arith.constant 0 : i32
    %c0_i32_0 = arith.constant 0 : i32
    %c0_i32_1 = arith.constant 0 : i32
    return %c0_i32, %c0_i32_0 : i32, i32
  }
  func.func @transform_6(%arg0: i32) -> i32 {
    %c0_i32 = arith.constant 0 : i32
    %c0_i32_0 = arith.constant 0 : i32
    return %c0_i32 : i32
  }
  func.func @transform_7(%arg0: i32) -> (i32, i32, i32) {
    %c0_i32 = arith.constant 0 : i32
    %c0_i32_0 = arith.constant 0 : i32
    %c0_i32_1 = arith.constant 0 : i32
    return %c0_i32, %arg0, %c0_i32_0 : i32, i32, i32
  }
}

</mosaic_0001>

<llo_original>
// kernel: tpu_custom_call.1
$region0: #{tpu_custom_call.1}
  #allocation0 [shape = 'u32[]', space=smem, size = 0x4, offset = 0x4, fixed_abs, tag = 'smem constant byte address 0x4 - core index']
  #allocation1 [shape = 'u32[72,128]{1,0:T(1,128)}', space=vmem, size = 0x9000, scoped, tag = 'internal scratch']
  %s0 = inlined_call_operand.hbm [shape: f32[4,16,128], index: 0, kind: input, shape index: {}]
  %s1 = inlined_call_operand.vmem [shape: f32[8,4], index: 1, kind: input, shape index: {}]
  %s2 = inlined_call_operand.vmem [shape: f32[8], index: 2, kind: input, shape index: {}]
  %s3 = inlined_call_operand.vmem [shape: f32[4,8], index: 3, kind: input, shape index: {}]
  %s4 = inlined_call_operand.vmem [shape: f32[4], index: 4, kind: input, shape index: {}]
  %s5 = inlined_call_operand.vmem [shape: f32[2,4], index: 5, kind: input, shape index: {}]
  %s6 = inlined_call_operand.vmem [shape: f32[2], index: 6, kind: input, shape index: {}]
  %s7 = inlined_call_operand.hbm [shape: f32[2,16,128], index: 7, kind: output, shape index: {}]
  %s8 = sld [smem:[#allocation0]]
  $region66: #{tpu_custom_call.1} parent=0
    _
  %s10 = ssub.s32 1, %s8
  %s11 = scalar_select 0, %s10, %s8
  $region1: #{tpu_custom_call.1} parent=0
    #allocation2 [shape = 'u8[32768]{0}', space=vmem, size = 0x8000, scoped, tag = 'input window, operand 0, single buffered']
    #allocation3 [shape = 's32[1]{0}', space=sflag, size = 0x4, scoped, tag = 'scoped memory for tpu_custom_call.1']
    #allocation4 [shape = 's32[1]{0}', space=sflag, size = 0x4, scoped, tag = 'scoped memory for tpu_custom_call.1']
    #allocation5 [shape = 's32[1]{0}', space=sflag, size = 0x4, scoped, tag = 'scoped memory for tpu_custom_call.1']
    #allocation6 [shape = 'u8[4096]{0}', space=smem, size = 0x1000, scoped, tag = 'input window, operand 1, single buffered']
    #allocation7 [shape = 'u8[512]{0}', space=smem, size = 0x200, scoped, tag = 'input window, operand 2, single buffered']
    #allocation8 [shape = 's32[1]{0}', space=sflag, size = 0x4, scoped, tag = 'scoped memory for tpu_custom_call.1']
    #allocation9 [shape = 'u8[2048]{0}', space=smem, size = 0x800, scoped, tag = 'input window, operand 3, single buffered']
    #allocation10 [shape = 'u8[512]{0}', space=smem, size = 0x200, scoped, tag = 'input window, operand 4, single buffered']
    #allocation11 [shape = 's32[1]{0}', space=sflag, size = 0x4, scoped, tag = 'scoped memory for tpu_custom_call.1']
    #allocation12 [shape = 'u8[1024]{0}', space=smem, size = 0x400, scoped, tag = 'input window, operand 5, single buffered']
    #allocation13 [shape = 'u8[512]{0}', space=smem, size = 0x200, scoped, tag = 'input window, operand 6, single buffered']
    #allocation14 [shape = 's32[1]{0}', space=sflag, size = 0x4, scoped, tag = 'scoped memory for tpu_custom_call.1']
    #allocation15 [shape = 'u8[16384]{0}', space=vmem, size = 0x4000, scoped, tag = 'output window, operand 0, single buffered']
    %12 = vsyncpa [#allocation3], 0
    %13 = vsyncpa [#allocation5], 0
    %14 = vsyncpa [#allocation8], 0
    %15 = vsyncpa [#allocation11], 0
    %16 = vsyncpa [#allocation14], 0
    %17 = vsyncpa [#allocation4], 0
    // Predicated region
    $region2: #{tpu_custom_call.1} parent=1 // pred_check
      _
    $region3: #{tpu_custom_call.1} parent=1 // pred_check_branch
      %19 = sbr.rel (0) target = $region5
    $region4: #{tpu_custom_call.1} parent=1 // pred_region
      %21 = vsyncadd [#allocation3], 0
      %s22 = sshll.u32 %s0, 4
      %s23 = int_to_ptr.hbm [resolvable:$true] %s22
      %s24 = sshll.u32 [#allocation2], 4
      %s25 = int_to_ptr.vmem [resolvable:$true] %s24
      %30 = dma.hbm_to_vmem [thread:$0]  %s23, 1024, %s25, [#allocation3], 128, 128, 8
    $region5: #{tpu_custom_call.1} parent=1 // pred_fallthru
      _
    // Predicated region
    $region6: #{tpu_custom_call.1} parent=1 // pred_check
      _
    $region7: #{tpu_custom_call.1} parent=1 // pred_check_branch
      %32 = sbr.rel (0) target = $region9
    $region8: #{tpu_custom_call.1} parent=1 // pred_region
      %34 = vsyncadd [#allocation5], 0
      %s36 = sshll.u32 %s1, 4
      %s37 = int_to_ptr.vmem [resolvable:$true] %s36
      %39 = dma.vmem_to_smem %s37, 128, [#allocation6], [#allocation5]
    $region9: #{tpu_custom_call.1} parent=1 // pred_fallthru
      _
    // Predicated region
    $region10: #{tpu_custom_call.1} parent=1 // pred_check
      _
    $region11: #{tpu_custom_call.1} parent=1 // pred_check_branch
      %41 = sbr.rel (0) target = $region13
    $region12: #{tpu_custom_call.1} parent=1 // pred_region
      %43 = vsyncadd [#allocation8], 0
      %s45 = sshll.u32 %s2, 4
      %s46 = int_to_ptr.vmem [resolvable:$true] %s45
      %48 = dma.vmem_to_smem %s46, 16, [#allocation7], [#allocation8]
    $region13: #{tpu_custom_call.1} parent=1 // pred_fallthru
      _
    // Predicated region
    $region14: #{tpu_custom_call.1} parent=1 // pred_check
      _
    $region15: #{tpu_custom_call.1} parent=1 // pred_check_branch
      %50 = sbr.rel (0) target = $region17
    $region16: #{tpu_custom_call.1} parent=1 // pred_region
      %52 = vsyncadd [#allocation8], 0
      %s54 = sshll.u32 %s3, 4
      %s55 = int_to_ptr.vmem [resolvable:$true] %s54
      %57 = dma.vmem_to_smem %s55, 64, [#allocation9], [#allocation8]
    $region17: #{tpu_custom_call.1} parent=1 // pred_fallthru
      _
    // Predicated region
    $region18: #{tpu_custom_call.1} parent=1 // pred_check
      _
    $region19: #{tpu_custom_call.1} parent=1 // pred_check_branch
      %59 = sbr.rel (0) target = $region21
    $region20: #{tpu_custom_call.1} parent=1 // pred_region
      %61 = vsyncadd [#allocation11], 0
      %s63 = sshll.u32 %s4, 4
      %s64 = int_to_ptr.vmem [resolvable:$true] %s63
      %66 = dma.vmem_to_smem %s64, 16, [#allocation10], [#allocation11]
    $region21: #{tpu_custom_call.1} parent=1 // pred_fallthru
      _
    // Predicated region
    $region22: #{tpu_custom_call.1} parent=1 // pred_check
      _
    $region23: #{tpu_custom_call.1} parent=1 // pred_check_branch
      %68 = sbr.rel (0) target = $region25
    $region24: #{tpu_custom_call.1} parent=1 // pred_region
      %70 = vsyncadd [#allocation11], 0
      %s72 = sshll.u32 %s5, 4
      %s73 = int_to_ptr.vmem [resolvable:$true] %s72
      %75 = dma.vmem_to_smem %s73, 32, [#allocation12], [#allocation11]
    $region25: #{tpu_custom_call.1} parent=1 // pred_fallthru
      _
    // Predicated region
    $region26: #{tpu_custom_call.1} parent=1 // pred_check
      _
    $region27: #{tpu_custom_call.1} parent=1 // pred_check_branch
      %77 = sbr.rel (0) target = $region29
    $region28: #{tpu_custom_call.1} parent=1 // pred_region
      %79 = vsyncadd [#allocation14], 0
      %s81 = sshll.u32 %s6, 4
      %s82 = int_to_ptr.vmem [resolvable:$true] %s81
      %84 = dma.vmem_to_smem %s82, 16, [#allocation13], [#allocation14]
    $region29: #{tpu_custom_call.1} parent=1 // pred_fallthru
      _
    // Predicated region
    $region30: #{tpu_custom_call.1} parent=1 // pred_check
      _
    $region31: #{tpu_custom_call.1} parent=1 // pred_check_branch
      %86 = sbr.rel (0) target = $region33
    $region32: #{tpu_custom_call.1} parent=1 // pred_region
      %88 = dma.done [#allocation3], 1024
    $region33: #{tpu_custom_call.1} parent=1 // pred_fallthru
      _
    // Predicated region
    $region34: #{tpu_custom_call.1} parent=1 // pred_check
      _
    $region35: #{tpu_custom_call.1} parent=1 // pred_check_branch
      %90 = sbr.rel (0) target = $region37
    $region36: #{tpu_custom_call.1} parent=1 // pred_region
      %92 = dma.done [#allocation5], 128
    $region37: #{tpu_custom_call.1} parent=1 // pred_fallthru
      _
    // Predicated region
    $region38: #{tpu_custom_call.1} parent=1 // pred_check
      _
    $region39: #{tpu_custom_call.1} parent=1 // pred_check_branch
      %94 = sbr.rel (0) target = $region41
    $region40: #{tpu_custom_call.1} parent=1 // pred_region
      %96 = dma.done [#allocation8], 16
    $region41: #{tpu_custom_call.1} parent=1 // pred_fallthru
      _
    // Predicated region
    $region42: #{tpu_custom_call.1} parent=1 // pred_check
      _
    $region43: #{tpu_custom_call.1} parent=1 // pred_check_branch
      %98 = sbr.rel (0) target = $region45
    $region44: #{tpu_custom_call.1} parent=1 // pred_region
      %100 = dma.done [#allocation8], 64
    $region45: #{tpu_custom_call.1} parent=1 // pred_fallthru
      _
    // Predicated region
    $region46: #{tpu_custom_call.1} parent=1 // pred_check
      _
    $region47: #{tpu_custom_call.1} parent=1 // pred_check_branch
      %102 = sbr.rel (0) target = $region49
    $region48: #{tpu_custom_call.1} parent=1 // pred_region
      %104 = dma.done [#allocation11], 16
    $region49: #{tpu_custom_call.1} parent=1 // pred_fallthru
      _
    // Predicated region
    $region50: #{tpu_custom_call.1} parent=1 // pred_check
      _
    $region51: #{tpu_custom_call.1} parent=1 // pred_check_branch
      %106 = sbr.rel (0) target = $region53
    $region52: #{tpu_custom_call.1} parent=1 // pred_region
      %108 = dma.done [#allocation11], 32
    $region53: #{tpu_custom_call.1} parent=1 // pred_fallthru
      _
    // Predicated region
    $region54: #{tpu_custom_call.1} parent=1 // pred_check
      _
    $region55: #{tpu_custom_call.1} parent=1 // pred_check_branch
      %110 = sbr.rel (0) target = $region57
    $region56: #{tpu_custom_call.1} parent=1 // pred_region
      %112 = dma.done [#allocation14], 16
    $region57: #{tpu_custom_call.1} parent=1 // pred_fallthru
      _
    %113 = sfence
    %s114 = sld [smem:[#allocation6]]
    %s115 = sld [smem:[#allocation6 + $0x1]]
    %s116 = sld [smem:[#allocation6 + $0x2]]
    %s117 = sld [smem:[#allocation6 + $0x3]]
    %s118 = sld [smem:[#allocation6 + $0x80]]
    %s119 = sld [smem:[#allocation6 + $0x81]]
    %s120 = sld [smem:[#allocation6 + $0x82]]
    %s121 = sld [smem:[#allocation6 + $0x83]]
    %s122 = sld [smem:[#allocation6 + $0x100]]
    %s123 = sld [smem:[#allocation6 + $0x101]]
    %s124 = sld [smem:[#allocation6 + $0x102]]
    %s125 = sld [smem:[#allocation6 + $0x103]]
    %s126 = sld [smem:[#allocation6 + $0x180]]
    %s127 = sld [smem:[#allocation6 + $0x181]]
    %s128 = sld [smem:[#allocation6 + $0x182]]
    %s129 = sld [smem:[#allocation6 + $0x183]]
    %s130 = sld [smem:[#allocation6 + $0x200]]
    %s131 = sld [smem:[#allocation6 + $0x201]]
    %s132 = sld [smem:[#allocation6 + $0x202]]
    %s133 = sld [smem:[#allocation6 + $0x203]]
    %s134 = sld [smem:[#allocation6 + $0x280]]
    %s135 = sld [smem:[#allocation6 + $0x281]]
    %s136 = sld [smem:[#allocation6 + $0x282]]
    %s137 = sld [smem:[#allocation6 + $0x283]]
    %s138 = sld [smem:[#allocation6 + $0x300]]
    %s139 = sld [smem:[#allocation6 + $0x301]]
    %s140 = sld [smem:[#allocation6 + $0x302]]
    %s141 = sld [smem:[#allocation6 + $0x303]]
    %s142 = sld [smem:[#allocation6 + $0x380]]
    %s143 = sld [smem:[#allocation6 + $0x381]]
    %s144 = sld [smem:[#allocation6 + $0x382]]
    %s145 = sld [smem:[#allocation6 + $0x383]]
    %s146 = sld [smem:[#allocation7]]
    %s147 = sld [smem:[#allocation7 + $0x1]]
    %s148 = sld [smem:[#allocation7 + $0x2]]
    %s149 = sld [smem:[#allocation7 + $0x3]]
    %s150 = sld [smem:[#allocation7 + $0x4]]
    %s151 = sld [smem:[#allocation7 + $0x5]]
    %s152 = sld [smem:[#allocation7 + $0x6]]
    %s153 = sld [smem:[#allocation7 + $0x7]]
    %s154 = sld [smem:[#allocation9]]
    %s155 = sld [smem:[#allocation9 + $0x1]]
    %s156 = sld [smem:[#allocation9 + $0x2]]
    %s157 = sld [smem:[#allocation9 + $0x3]]
    %s158 = sld [smem:[#allocation9 + $0x4]]
    %s159 = sld [smem:[#allocation9 + $0x5]]
    %s160 = sld [smem:[#allocation9 + $0x6]]
    %s161 = sld [smem:[#allocation9 + $0x7]]
    %s162 = sld [smem:[#allocation9 + $0x80]]
    %s163 = sld [smem:[#allocation9 + $0x81]]
    %s164 = sld [smem:[#allocation9 + $0x82]]
    %s165 = sld [smem:[#allocation9 + $0x83]]
    %s166 = sld [smem:[#allocation9 + $0x84]]
    %s167 = sld [smem:[#allocation9 + $0x85]]
    %s168 = sld [smem:[#allocation9 + $0x86]]
    %s169 = sld [smem:[#allocation9 + $0x87]]
    %s170 = sld [smem:[#allocation9 + $0x100]]
    %s171 = sld [smem:[#allocation9 + $0x101]]
    %s172 = sld [smem:[#allocation9 + $0x102]]
    %s173 = sld [smem:[#allocation9 + $0x103]]
    %s174 = sld [smem:[#allocation9 + $0x104]]
    %s175 = sld [smem:[#allocation9 + $0x105]]
    %s176 = sld [smem:[#allocation9 + $0x106]]
    %s177 = sld [smem:[#allocation9 + $0x107]]
    %s178 = sld [smem:[#allocation9 + $0x180]]
    %s179 = sld [smem:[#allocation9 + $0x181]]
    %s180 = sld [smem:[#allocation9 + $0x182]]
    %s181 = sld [smem:[#allocation9 + $0x183]]
    %s182 = sld [smem:[#allocation9 + $0x184]]
    %s183 = sld [smem:[#allocation9 + $0x185]]
    %s184 = sld [smem:[#allocation9 + $0x186]]
    %s185 = sld [smem:[#allocation9 + $0x187]]
    %s186 = sld [smem:[#allocation10]]
    %s187 = sld [smem:[#allocation10 + $0x1]]
    %s188 = sld [smem:[#allocation10 + $0x2]]
    %s189 = sld [smem:[#allocation10 + $0x3]]
    %s190 = sld [smem:[#allocation12]]
    %s191 = sld [smem:[#allocation12 + $0x1]]
    %s192 = sld [smem:[#allocation12 + $0x2]]
    %s193 = sld [smem:[#allocation12 + $0x3]]
    %s194 = sld [smem:[#allocation12 + $0x80]]
    %s195 = sld [smem:[#allocation12 + $0x81]]
    %s196 = sld [smem:[#allocation12 + $0x82]]
    %s197 = sld [smem:[#allocation12 + $0x83]]
    %s198 = sld [smem:[#allocation13]]
    %s199 = sld [smem:[#allocation13 + $0x1]]
    %v200 = vld [vmem:[#allocation2] sm:$0xff]
    %v201 = vld [vmem:[#allocation2 + $0x8] sm:$0xff]
    %s202 = sadd.s32 0, 16
    %s203 = scalar_lea.vmem [#allocation2], %s202
    %v204 = vld [vmem:[%s203] sm:$0xff]
    %v205 = vld [vmem:[%s203 + $0x8] sm:$0xff]
    %s206 = sadd.s32 0, 32
    %s207 = scalar_lea.vmem [#allocation2], %s206
    %v208 = vld [vmem:[%s207] sm:$0xff]
    %v209 = vld [vmem:[%s207 + $0x8] sm:$0xff]
    %s210 = sadd.s32 0, 48
    %s211 = scalar_lea.vmem [#allocation2], %s210
    %v212 = vld [vmem:[%s211] sm:$0xff]
    %v213 = vld [vmem:[%s211 + $0x8] sm:$0xff]
    %v214 = vstv %s114
    %v215 = vmul.f32 %v200, %v214
    %v216 = vmul.f32 %v201, %v214
    %v217 = vstv %s115
    %v218 = vmul.f32 %v204, %v217
    %v219 = vmul.f32 %v205, %v217
    %v220 = vadd.f32 %v215, %v218
    %v221 = vadd.f32 %v216, %v219
    %v222 = vstv %s116
    %v223 = vmul.f32 %v208, %v222
    %v224 = vmul.f32 %v209, %v222
    %v225 = vadd.f32 %v220, %v223
    %v226 = vadd.f32 %v221, %v224
    %v227 = vstv %s117
    %v228 = vmul.f32 %v212, %v227
    %v229 = vmul.f32 %v213, %v227
    %v230 = vadd.f32 %v225, %v228
    %v231 = vadd.f32 %v226, %v229
    %v232 = vstv %s146
    %v233 = vadd.f32 %v230, %v232
    %v234 = vadd.f32 %v231, %v232
    %v235 = vmax.f32 %v233, 0.0
    %v236 = vmax.f32 %v234, 0.0
    %v237 = vstv %s118
    %v238 = vmul.f32 %v200, %v237
    %v239 = vmul.f32 %v201, %v237
    %v240 = vstv %s119
    %v241 = vmul.f32 %v204, %v240
    %v242 = vmul.f32 %v205, %v240
    %v243 = vadd.f32 %v238, %v241
    %v244 = vadd.f32 %v239, %v242
    %v245 = vstv %s120
    %v246 = vmul.f32 %v208, %v245
    %v247 = vmul.f32 %v209, %v245
    %v248 = vadd.f32 %v243, %v246
    %v249 = vadd.f32 %v244, %v247
    %v250 = vstv %s121
    %v251 = vmul.f32 %v212, %v250
    %v252 = vmul.f32 %v213, %v250
    %v253 = vadd.f32 %v248, %v251
    %v254 = vadd.f32 %v249, %v252
    %v255 = vstv %s147
    %v256 = vadd.f32 %v253, %v255
    %v257 = vadd.f32 %v254, %v255
    %v258 = vmax.f32 %v256, 0.0
    %v259 = vmax.f32 %v257, 0.0
    %v260 = vstv %s122
    %v261 = vmul.f32 %v200, %v260
    %v262 = vmul.f32 %v201, %v260
    %v263 = vstv %s123
    %v264 = vmul.f32 %v204, %v263
    %v265 = vmul.f32 %v205, %v263
    %v266 = vadd.f32 %v261, %v264
    %v267 = vadd.f32 %v262, %v265
    %v268 = vstv %s124
    %v269 = vmul.f32 %v208, %v268
    %v270 = vmul.f32 %v209, %v268
    %v271 = vadd.f32 %v266, %v269
    %v272 = vadd.f32 %v267, %v270
    %v273 = vstv %s125
    %v274 = vmul.f32 %v212, %v273
    %v275 = vmul.f32 %v213, %v273
    %v276 = vadd.f32 %v271, %v274
    %v277 = vadd.f32 %v272, %v275
    %v278 = vstv %s148
    %v279 = vadd.f32 %v276, %v278
    %v280 = vadd.f32 %v277, %v278
    %v281 = vmax.f32 %v279, 0.0
    %v282 = vmax.f32 %v280, 0.0
    %v283 = vstv %s126
    %v284 = vmul.f32 %v200, %v283
    %v285 = vmul.f32 %v201, %v283
    %v286 = vstv %s127
    %v287 = vmul.f32 %v204, %v286
    %v288 = vmul.f32 %v205, %v286
    %v289 = vadd.f32 %v284, %v287
    %v290 = vadd.f32 %v285, %v288
    %v291 = vstv %s128
    %v292 = vmul.f32 %v208, %v291
    %v293 = vmul.f32 %v209, %v291
    %v294 = vadd.f32 %v289, %v292
    %v295 = vadd.f32 %v290, %v293
    %v296 = vstv %s129
    %v297 = vmul.f32 %v212, %v296
    %v298 = vmul.f32 %v213, %v296
    %v299 = vadd.f32 %v294, %v297
    %v300 = vadd.f32 %v295, %v298
    %v301 = vstv %s149
    %v302 = vadd.f32 %v299, %v301
    %v303 = vadd.f32 %v300, %v301
    %v304 = vmax.f32 %v302, 0.0
    %v305 = vmax.f32 %v303, 0.0
    %v306 = vstv %s130
    %v307 = vmul.f32 %v200, %v306
    %v308 = vmul.f32 %v201, %v306
    %v309 = vstv %s131
    %v310 = vmul.f32 %v204, %v309
    %v311 = vmul.f32 %v205, %v309
    %v312 = vadd.f32 %v307, %v310
    %v313 = vadd.f32 %v308, %v311
    %v314 = vstv %s132
    %v315 = vmul.f32 %v208, %v314
    %v316 = vmul.f32 %v209, %v314
    %v317 = vadd.f32 %v312, %v315
    %v318 = vadd.f32 %v313, %v316
    %v319 = vstv %s133
    %v320 = vmul.f32 %v212, %v319
    %v321 = vmul.f32 %v213, %v319
    %v322 = vadd.f32 %v317, %v320
    %v323 = vadd.f32 %v318, %v321
    %v324 = vstv %s150
    %v325 = vadd.f32 %v322, %v324
    %v326 = vadd.f32 %v323, %v324
    %v327 = vmax.f32 %v325, 0.0
    %v328 = vmax.f32 %v326, 0.0
    %v329 = vstv %s134
    %v330 = vmul.f32 %v200, %v329
    %v331 = vmul.f32 %v201, %v329
    %v332 = vstv %s135
    %v333 = vmul.f32 %v204, %v332
    %v334 = vmul.f32 %v205, %v332
    %v335 = vadd.f32 %v330, %v333
    %v336 = vadd.f32 %v331, %v334
    %v337 = vstv %s136
    %v338 = vmul.f32 %v208, %v337
    %v339 = vmul.f32 %v209, %v337
    %v340 = vadd.f32 %v335, %v338
    %v341 = vadd.f32 %v336, %v339
    %v342 = vstv %s137
    %v343 = vmul.f32 %v212, %v342
    %v344 = vmul.f32 %v213, %v342
    %v345 = vadd.f32 %v340, %v343
    %v346 = vadd.f32 %v341, %v344
    %v347 = vstv %s151
    %v348 = vadd.f32 %v345, %v347
    %v349 = vadd.f32 %v346, %v347
    %v350 = vmax.f32 %v348, 0.0
    %v351 = vmax.f32 %v349, 0.0
    %v352 = vstv %s138
    %v353 = vmul.f32 %v200, %v352
    %v354 = vmul.f32 %v201, %v352
    %v355 = vstv %s139
    %v356 = vmul.f32 %v204, %v355
    %v357 = vmul.f32 %v205, %v355
    %v358 = vadd.f32 %v353, %v356
    %v359 = vadd.f32 %v354, %v357
    %v360 = vstv %s140
    %v361 = vmul.f32 %v208, %v360
    %v362 = vmul.f32 %v209, %v360
    %v363 = vadd.f32 %v358, %v361
    %v364 = vadd.f32 %v359, %v362
    %v365 = vstv %s141
    %v366 = vmul.f32 %v212, %v365
    %v367 = vmul.f32 %v213, %v365
    %v368 = vadd.f32 %v363, %v366
    %v369 = vadd.f32 %v364, %v367
    %v370 = vstv %s152
    %v371 = vadd.f32 %v368, %v370
    %v372 = vadd.f32 %v369, %v370
    %v373 = vmax.f32 %v371, 0.0
    %v374 = vmax.f32 %v372, 0.0
    %v375 = vstv %s142
    %v376 = vmul.f32 %v200, %v375
    %v377 = vmul.f32 %v201, %v375
    %v378 = vstv %s143
    %v379 = vmul.f32 %v204, %v378
    %v380 = vmul.f32 %v205, %v378
    %v381 = vadd.f32 %v376, %v379
    %v382 = vadd.f32 %v377, %v380
    %v383 = vstv %s144
    %v384 = vmul.f32 %v208, %v383
    %v385 = vmul.f32 %v209, %v383
    %v386 = vadd.f32 %v381, %v384
    %v387 = vadd.f32 %v382, %v385
    %v388 = vstv %s145
    %v389 = vmul.f32 %v212, %v388
    %v390 = vmul.f32 %v213, %v388
    %v391 = vadd.f32 %v386, %v389
    %v392 = vadd.f32 %v387, %v390
    %v393 = vstv %s153
    %v394 = vadd.f32 %v391, %v393
    %v395 = vadd.f32 %v392, %v393
    %v396 = vmax.f32 %v394, 0.0
    %v397 = vmax.f32 %v395, 0.0
    %v398 = vstv %s154
    %v399 = vmul.f32 %v235, %v398
    %v400 = vmul.f32 %v236, %v398
    %v401 = vstv %s155
    %v402 = vmul.f32 %v258, %v401
    %v403 = vmul.f32 %v259, %v401
    %v404 = vadd.f32 %v399, %v402
    %v405 = vadd.f32 %v400, %v403
    %v406 = vstv %s156
    %v407 = vmul.f32 %v281, %v406
    %v408 = vmul.f32 %v282, %v406
    %v409 = vadd.f32 %v404, %v407
    %v410 = vadd.f32 %v405, %v408
    %v411 = vstv %s157
    %v412 = vmul.f32 %v304, %v411
    %v413 = vmul.f32 %v305, %v411
    %v414 = vadd.f32 %v409, %v412
    %v415 = vadd.f32 %v410, %v413
    %v416 = vstv %s158
    %v417 = vmul.f32 %v327, %v416
    %v418 = vmul.f32 %v328, %v416
    %v419 = vadd.f32 %v414, %v417
    %v420 = vadd.f32 %v415, %v418
    %v421 = vstv %s159
    %v422 = vmul.f32 %v350, %v421
    %v423 = vmul.f32 %v351, %v421
    %v424 = vadd.f32 %v419, %v422
    %v425 = vadd.f32 %v420, %v423
    %v426 = vstv %s160
    %v427 = vmul.f32 %v373, %v426
    %v428 = vmul.f32 %v374, %v426
    %v429 = vadd.f32 %v424, %v427
    %v430 = vadd.f32 %v425, %v428
    %v431 = vstv %s161
    %v432 = vmul.f32 %v396, %v431
    %v433 = vmul.f32 %v397, %v431
    %v434 = vadd.f32 %v429, %v432
    %v435 = vadd.f32 %v430, %v433
    %v436 = vstv %s186
    %v437 = vadd.f32 %v434, %v436
    %v438 = vadd.f32 %v435, %v436
    %v439 = vmax.f32 %v437, 0.0
    %v440 = vmax.f32 %v438, 0.0
    %v441 = vstv %s162
    %v442 = vmul.f32 %v235, %v441
    %v443 = vmul.f32 %v236, %v441
    %v444 = vstv %s163
    %v445 = vmul.f32 %v258, %v444
    %v446 = vmul.f32 %v259, %v444
    %v447 = vadd.f32 %v442, %v445
    %v448 = vadd.f32 %v443, %v446
    %v449 = vstv %s164
    %v450 = vmul.f32 %v281, %v449
    %v451 = vmul.f32 %v282, %v449
    %v452 = vadd.f32 %v447, %v450
    %v453 = vadd.f32 %v448, %v451
    %v454 = vstv %s165
    %v455 = vmul.f32 %v304, %v454
    %v456 = vmul.f32 %v305, %v454
    %v457 = vadd.f32 %v452, %v455
    %v458 = vadd.f32 %v453, %v456
    %v459 = vstv %s166
    %v460 = vmul.f32 %v327, %v459
    %v461 = vmul.f32 %v328, %v459
    %v462 = vadd.f32 %v457, %v460
    %v463 = vadd.f32 %v458, %v461
    %v464 = vstv %s167
    %v465 = vmul.f32 %v350, %v464
    %v466 = vmul.f32 %v351, %v464
    %v467 = vadd.f32 %v462, %v465
    %v468 = vadd.f32 %v463, %v466
    %v469 = vstv %s168
    %v470 = vmul.f32 %v373, %v469
    %v471 = vmul.f32 %v374, %v469
    %v472 = vadd.f32 %v467, %v470
    %v473 = vadd.f32 %v468, %v471
    %v474 = vstv %s169
    %v475 = vmul.f32 %v396, %v474
    %v476 = vmul.f32 %v397, %v474
    %v477 = vadd.f32 %v472, %v475
    %v478 = vadd.f32 %v473, %v476
    %v479 = vstv %s187
    %v480 = vadd.f32 %v477, %v479
    %v481 = vadd.f32 %v478, %v479
    %v482 = vmax.f32 %v480, 0.0
    %v483 = vmax.f32 %v481, 0.0
    %v484 = vstv %s170
    %v485 = vmul.f32 %v235, %v484
    %v486 = vmul.f32 %v236, %v484
    %v487 = vstv %s171
    %v488 = vmul.f32 %v258, %v487
    %v489 = vmul.f32 %v259, %v487
    %v490 = vadd.f32 %v485, %v488
    %v491 = vadd.f32 %v486, %v489
    %v492 = vstv %s172
    %v493 = vmul.f32 %v281, %v492
    %v494 = vmul.f32 %v282, %v492
    %v495 = vadd.f32 %v490, %v493
    %v496 = vadd.f32 %v491, %v494
    %v497 = vstv %s173
    %v498 = vmul.f32 %v304, %v497
    %v499 = vmul.f32 %v305, %v497
    %v500 = vadd.f32 %v495, %v498
    %v501 = vadd.f32 %v496, %v499
    %v502 = vstv %s174
    %v503 = vmul.f32 %v327, %v502
    %v504 = vmul.f32 %v328, %v502
    %v505 = vadd.f32 %v500, %v503
    %v506 = vadd.f32 %v501, %v504
    %v507 = vstv %s175
    %v508 = vmul.f32 %v350, %v507
    %v509 = vmul.f32 %v351, %v507
    %v510 = vadd.f32 %v505, %v508
    %v511 = vadd.f32 %v506, %v509
    %v512 = vstv %s176
    %v513 = vmul.f32 %v373, %v512
    %v514 = vmul.f32 %v374, %v512
    %v515 = vadd.f32 %v510, %v513
    %v516 = vadd.f32 %v511, %v514
    %v517 = vstv %s177
    %v518 = vmul.f32 %v396, %v517
    %v519 = vmul.f32 %v397, %v517
    %v520 = vadd.f32 %v515, %v518
    %v521 = vadd.f32 %v516, %v519
    %v522 = vstv %s188
    %v523 = vadd.f32 %v520, %v522
    %v524 = vadd.f32 %v521, %v522
    %v525 = vmax.f32 %v523, 0.0
    %v526 = vmax.f32 %v524, 0.0
    %v527 = vstv %s178
    %v528 = vmul.f32 %v235, %v527
    %v529 = vmul.f32 %v236, %v527
    %v530 = vstv %s179
    %v531 = vmul.f32 %v258, %v530
    %v532 = vmul.f32 %v259, %v530
    %v533 = vadd.f32 %v528, %v531
    %v534 = vadd.f32 %v529, %v532
    %v535 = vstv %s180
    %v536 = vmul.f32 %v281, %v535
    %v537 = vmul.f32 %v282, %v535
    %v538 = vadd.f32 %v533, %v536
    %v539 = vadd.f32 %v534, %v537
    %v540 = vstv %s181
    %v541 = vmul.f32 %v304, %v540
    %v542 = vmul.f32 %v305, %v540
    %v543 = vadd.f32 %v538, %v541
    %v544 = vadd.f32 %v539, %v542
    %v545 = vstv %s182
    %v546 = vmul.f32 %v327, %v545
    %v547 = vmul.f32 %v328, %v545
    %v548 = vadd.f32 %v543, %v546
    %v549 = vadd.f32 %v544, %v547
    %v550 = vstv %s183
    %v551 = vmul.f32 %v350, %v550
    %v552 = vmul.f32 %v351, %v550
    %v553 = vadd.f32 %v548, %v551
    %v554 = vadd.f32 %v549, %v552
    %v555 = vstv %s184
    %v556 = vmul.f32 %v373, %v555
    %v557 = vmul.f32 %v374, %v555
    %v558 = vadd.f32 %v553, %v556
    %v559 = vadd.f32 %v554, %v557
    %v560 = vstv %s185
    %v561 = vmul.f32 %v396, %v560
    %v562 = vmul.f32 %v397, %v560
    %v563 = vadd.f32 %v558, %v561
    %v564 = vadd.f32 %v559, %v562
    %v565 = vstv %s189
    %v566 = vadd.f32 %v563, %v565
    %v567 = vadd.f32 %v564, %v565
    %v568 = vmax.f32 %v566, 0.0
    %v569 = vmax.f32 %v567, 0.0
    %v570 = vstv %s190
    %v571 = vmul.f32 %v439, %v570
    %v572 = vmul.f32 %v440, %v570
    %v573 = vstv %s191
    %v574 = vmul.f32 %v482, %v573
    %v575 = vmul.f32 %v483, %v573
    %v576 = vadd.f32 %v571, %v574
    %v577 = vadd.f32 %v572, %v575
    %v578 = vstv %s192
    %v579 = vmul.f32 %v525, %v578
    %v580 = vmul.f32 %v526, %v578
    %v581 = vadd.f32 %v576, %v579
    %v582 = vadd.f32 %v577, %v580
    %v583 = vstv %s193
    %v584 = vmul.f32 %v568, %v583
    %v585 = vmul.f32 %v569, %v583
    %v586 = vadd.f32 %v581, %v584
    %v587 = vadd.f32 %v582, %v585
    %v588 = vstv %s198
    %v589 = vadd.f32 %v586, %v588
    %v590 = vadd.f32 %v587, %v588
    %v591 = vtanh.pop %v589
    %v592 = vtanh.pop %v590
    %593 = vst [vmem:[#allocation15] sm:$0xff] %v591
    %594 = vst [vmem:[#allocation15 + $0x8] sm:$0xff] %v592
    %v595 = vstv %s194
    %v596 = vmul.f32 %v439, %v595
    %v597 = vmul.f32 %v440, %v595
    %v598 = vstv %s195
    %v599 = vmul.f32 %v482, %v598
    %v600 = vmul.f32 %v483, %v598
    %v601 = vadd.f32 %v596, %v599
    %v602 = vadd.f32 %v597, %v600
    %v603 = vstv %s196
    %v604 = vmul.f32 %v525, %v603
    %v605 = vmul.f32 %v526, %v603
    %v606 = vadd.f32 %v601, %v604
    %v607 = vadd.f32 %v602, %v605
    %v608 = vstv %s197
    %v609 = vmul.f32 %v568, %v608
    %v610 = vmul.f32 %v569, %v608
    %v611 = vadd.f32 %v606, %v609
    %v612 = vadd.f32 %v607, %v610
    %v613 = vstv %s199
    %v614 = vadd.f32 %v611, %v613
    %v615 = vadd.f32 %v612, %v613
    %v616 = vtanh.pop %v614
    %v617 = vtanh.pop %v615
    %s618 = scalar_lea.vmem [#allocation15], %s202
    %619 = vst [vmem:[%s618] sm:$0xff] %v616
    %620 = vst [vmem:[%s618 + $0x8] sm:$0xff] %v617
    // Predicated region
    $region58: #{tpu_custom_call.1} parent=1 // pred_check
      _
    $region59: #{tpu_custom_call.1} parent=1 // pred_check_branch
      %622 = sbr.rel (0) target = $region61
    $region60: #{tpu_custom_call.1} parent=1 // pred_region
      %624 = vsyncadd [#allocation4], 0
      %s625 = sshll.u32 [#allocation15], 4
      %s626 = int_to_ptr.vmem [resolvable:$true] %s625
      %s627 = sshll.u32 %s7, 4
      %s628 = int_to_ptr.hbm [resolvable:$true] %s627
      %633 = dma.vmem_to_hbm [thread:$0]  %s626, 512, %s628, [#allocation4], 128, 128, 8
    $region61: #{tpu_custom_call.1} parent=1 // pred_fallthru
      _
    // Predicated region
    $region62: #{tpu_custom_call.1} parent=1 // pred_check
      _
    $region63: #{tpu_custom_call.1} parent=1 // pred_check_branch
      %635 = sbr.rel (0) target = $region65
    $region64: #{tpu_custom_call.1} parent=1 // pred_region
      %637 = dma.done [#allocation4], 512
    $region65: #{tpu_custom_call.1} parent=1 // pred_fallthru
      _
    %638 = vsyncpa [#allocation3], 1
    %639 = vsyncpa [#allocation4], 1
    %640 = vsyncpa [#allocation5], 1
    %641 = vsyncpa [#allocation8], 1
    %642 = vsyncpa [#allocation11], 1
    %643 = vsyncpa [#allocation14], 1

</llo_original>
